<compile_context>
chip_gen: v5e
topology: v5e:2x2
jax: 0.10.0
libtpu: 0.0.40
codegen_flags: <defaults>
</compile_context>

<pallas_src>
import jax
import jax.numpy as jnp
from jax import lax
from jax.experimental import pallas as pl
from jax.experimental.pallas import tpu as pltpu  # noqa: F401 (TPU backend)

# ----------------------- small, forward-consistent config -------------------
B, T, D = 2, 8, 16          # x: [B, T, D]
NUM_CUT = 4                 # args.num_cut -> n = T // NUM_CUT, a = NUM_CUT
EMBED_DIM = 32              # args.embed_dim
N_EMBED = 16                # args.n_embed (codebook size)
N_CLASSES = 4               # args.n_classes

M_TOK = B * T               # 16 tokens total
TOK_PER_B = T               # 8 tokens per batch element
LANES = 128

EPS_LOG = 1e-8
EPS_LN = 1e-5
EPS_BN = 1e-5

# Weight-slab row offsets (all multiples of 16 -> aligned for packed bf16
# sublanes, so every static slice is a zero-cost view).
R_DFT, R_WENC, R_CB, R_W1, R_W2, R_W3, R_POOL = 0, 16, 32, 48, 80, 112, 144
R_TOTAL = 152
W3_PAD = LANES - EMBED_DIM   # 96: logits live in cols 0:N_CLASSES of this block


def _full(shape):
    """Full-array BlockSpec for a grid=(1,) pallas_call."""
    nd = len(shape)
    return pl.BlockSpec(shape, lambda i, nd=nd: (0,) * nd)


# ------------------------------- fused kernel --------------------------------
def fused_kernel(x_ref, w_ref, s_ref, out_ref):
    """FFT feats -> encoder proj -> NormEMA VQ -> mean -> LN -> mlp_head."""
    f32 = jnp.float32
    bf16 = jnp.bfloat16
    C = EMBED_DIM

    # ---- encode: DFT -> log|imag| ++ log|real| -> encoder projection --------
    x = x_ref[...]                                                    # [M, D] bf16
    # DFT columns are [imag(k=0..D/2-1) | real(k=0..D/2-1)]: one MXU matmul.
    xf = jnp.dot(x, w_ref[R_DFT:R_DFT + D, 0:D],
                 preferred_element_type=f32)                          # [M, D]
    feats = jnp.log(jnp.abs(xf) + EPS_LOG)                            # [M, D] f32
    feat = (jnp.dot(feats.astype(bf16), w_ref[R_WENC:R_WENC + D, 0:C],
                    preferred_element_type=f32) + s_ref[0:1, 0:C])    # [M, C]

    # ---- NormEMA VQ: l2-normalize -> nearest code -> straight-through -------
    sq = jnp.sum(feat * feat, axis=-1, keepdims=True)
    zn = feat * lax.rsqrt(jnp.maximum(sq, 1e-24))
    cb = w_ref[R_CB:R_CB + N_EMBED, 0:C]                              # [K, C] bf16
    # codebook rows are unit-norm -> argmin distance == argmax score
    scores = lax.dot_general(zn.astype(bf16), cb, (((1,), (1,)), ((), ())),
                             preferred_element_type=f32)              # [M, K]
    max_s = jnp.max(scores, axis=-1, keepdims=True)
    iota = lax.broadcasted_iota(jnp.int32, scores.shape, 1)
    # first-match tie break (matches torch.argmin semantics)
    idx = jnp.min(jnp.where(scores >= max_s, iota, N_EMBED),
                  axis=-1, keepdims=True)                             # [M, 1]
    onehot = (iota == idx).astype(bf16)                               # [M, K]

    # ---- per-batch token mean: (pool @ onehot) @ codebook --------------------
    # pool is a compile-time constant hoisted into the weight slab; zq [M, C]
    # is never materialized.  pool/onehot values are exact in bf16.
    pool = w_ref[R_POOL:R_POOL + B, 0:M_TOK]                          # [B, M]
    code_w = jnp.dot(pool, onehot, preferred_element_type=f32)        # [B, K]
    pooled = jnp.dot(code_w.astype(bf16), cb,
                     preferred_element_type=f32)                      # [B, C]

    # ---- LayerNorm(embed_dim) -------------------------------------------------
    mu = jnp.mean(pooled, axis=-1, keepdims=True)
    var = jnp.mean((pooled - mu) ** 2, axis=-1, keepdims=True)
    q = ((pooled - mu) * lax.rsqrt(var + EPS_LN) * s_ref[1:2, 0:C]
         + s_ref[2:3, 0:C])                                           # [B, C] f32

    # ---- mlp_head with eval BatchNorms folded into the linears ---------------
    h = jnp.maximum(
        jnp.dot(q.astype(bf16), w_ref[R_W1:R_W1 + C, 0:C],
                preferred_element_type=f32) + s_ref[3:4, 0:C], 0.0)
    h = jnp.maximum(
        jnp.dot(h.astype(bf16), w_ref[R_W2:R_W2 + C, 0:C],
                preferred_element_type=f32) + s_ref[4:5, 0:C], 0.0)
    # w3 is stored pre-padded to 96 lanes (logits in cols 0:N_CLASSES, zeros
    # elsewhere) so this directly produces the logits+pad half of the output.
    logit_pad = (jnp.dot(h.astype(bf16), w_ref[R_W3:R_W3 + C, 0:W3_PAD],
                         preferred_element_type=f32) + s_ref[5:6, 0:W3_PAD])

    # ---- single lane-dense [B, 128] store ------------------------------------
    out_ref[...] = jnp.concatenate([q, logit_pad], axis=-1)


# ------------------------------ params ---------------------------------------
def init_params(key):
    ks = jax.random.split(key, 6)
    c = EMBED_DIM

    # DFT: X[k] = sum_n x[n] (cos(2pi nk/N) - i sin(2pi nk/N)), k = 0..D/2-1
    # (matches torch.fft.fft(...)[..., 0:t//2] imag/real slices).
    n_idx = jnp.arange(D, dtype=jnp.float32)[:, None]
    k_idx = jnp.arange(D // 2, dtype=jnp.float32)[None, :]
    ang = 2.0 * jnp.pi * n_idx * k_idx / D
    dft = jnp.concatenate([-jnp.sin(ang), jnp.cos(ang)], axis=1)       # [D, D]

    # TODO(synk): BSIblock.forward_feature stand-in: per-token linear projection.
    w_enc = jax.random.normal(ks[0], (D, c), jnp.float32) * 0.02
    b_enc = jnp.zeros((c,), jnp.float32)

    cb = jax.random.normal(ks[1], (N_EMBED, c), jnp.float32)
    cb = cb / jnp.linalg.norm(cb, axis=-1, keepdims=True)              # NormEMA codebook

    ln_g = jnp.ones((c,), jnp.float32)
    ln_b = jnp.zeros((c,), jnp.float32)

    # mlp_head raw parameters + eval-mode BN stats (fresh init).
    w1 = jax.random.normal(ks[2], (c, c), jnp.float32) * 0.02
    w2 = jax.random.normal(ks[3], (c, c), jnp.float32) * 0.02
    w3 = jax.random.normal(ks[4], (c, N_CLASSES), jnp.float32) * 0.02
    b3 = jnp.zeros((N_CLASSES,), jnp.float32)

    def bn_fold(w, bias, gamma, beta, rmean, rvar):
        """Fold eval-mode BatchNorm1d into the preceding Linear: y = x@w' + b'."""
        s = gamma * lax.rsqrt(rvar + EPS_BN)
        return w * s[None, :], (bias - rmean) * s + beta

    zc = jnp.zeros((c,), jnp.float32)
    oc = jnp.ones((c,), jnp.float32)
    w1f, b1f = bn_fold(w1, zc, oc, zc, zc, oc)              # Linear(no bias)+BN+ReLU
    w2f, b2f = bn_fold(w2, zc, oc, zc, zc, oc)              # Linear(no bias)+BN+ReLU
    w3f, b3f = bn_fold(w3, b3,                              # Linear(bias)+BN(affine=False)
                       jnp.ones((N_CLASSES,), jnp.float32),
                       jnp.zeros((N_CLASSES,), jnp.float32),
                       jnp.zeros((N_CLASSES,), jnp.float32),
                       jnp.ones((N_CLASSES,), jnp.float32))

    # Constant per-batch mean-pooling matrix, hoisted out of the kernel.
    row_b = jnp.arange(B, dtype=jnp.int32)[:, None]
    col_t = jnp.arange(M_TOK, dtype=jnp.int32)[None, :]
    pool = ((col_t // TOK_PER_B) == row_b).astype(jnp.float32) / TOK_PER_B  # [B, M]

    # --- packed bf16 weight slab [R_TOTAL, 128]: ONE DMA for all matrices ----
    wslab = jnp.zeros((R_TOTAL, LANES), jnp.float32)
    wslab = wslab.at[R_DFT:R_DFT + D, 0:D].set(dft)
    wslab = wslab.at[R_WENC:R_WENC + D, 0:c].set(w_enc)
    wslab = wslab.at[R_CB:R_CB + N_EMBED, 0:c].set(cb)
    wslab = wslab.at[R_W1:R_W1 + c, 0:c].set(w1f)
    wslab = wslab.at[R_W2:R_W2 + c, 0:c].set(w2f)
    wslab = wslab.at[R_W3:R_W3 + c, 0:N_CLASSES].set(w3f)
    wslab = wslab.at[R_POOL:R_POOL + B, 0:M_TOK].set(pool)
    wslab = wslab.astype(jnp.bfloat16)

    # --- packed f32 small-vector slab [8, 128]: ONE DMA for all biases -------
    # rows: [b_enc, ln_gamma, ln_beta, b1_folded, b2_folded, b3_folded(padded)]
    sslab = jnp.zeros((8, LANES), jnp.float32)
    sslab = sslab.at[0, 0:c].set(b_enc)
    sslab = sslab.at[1, 0:c].set(ln_g)
    sslab = sslab.at[2, 0:c].set(ln_b)
    sslab = sslab.at[3, 0:c].set(b1f)
    sslab = sslab.at[4, 0:c].set(b2f)
    sslab = sslab.at[5, 0:N_CLASSES].set(b3f)

    return dict(wslab=wslab, sslab=sslab)


# ------------------------------ wrapper ---------------------------------------
def bsiformer_vq_forward(x, p):
    Bx, Tx, Dx = x.shape
    # reshape(B, T//num_cut, num_cut, D) flattened token-major: M = B*T tokens.
    M = Bx * Tx
    x_tok = x.reshape(M, Dx).astype(jnp.bfloat16)

    out = pl.pallas_call(
        fused_kernel,
        grid=(1,),
        in_specs=[_full((M, Dx)),
                  _full((R_TOTAL, LANES)),
                  _full((8, LANES))],
        out_specs=_full((Bx, LANES)),
        out_shape=jax.ShapeDtypeStruct((Bx, LANES), jnp.float32),
    )(x_tok, p["wslab"], p["sslab"])

    # forward() returns (logit, quantize-after-LayerNorm)
    pooled = out[:, 0:EMBED_DIM]
    logits = out[:, EMBED_DIM:EMBED_DIM + N_CLASSES]
    return logits, pooled


if __name__ == "__main__":
    key = jax.random.PRNGKey(0)
    k_x, k_p = jax.random.split(key)
    x = jax.random.normal(k_x, (B, T, D), jnp.float32)
    params = init_params(k_p)

    fwd = jax.jit(bsiformer_vq_forward)
    logits, pooled = fwd(x, params)
    jax.block_until_ready((logits, pooled))

    assert logits.shape == (B, N_CLASSES)
    assert pooled.shape == (B, EMBED_DIM)
    print("KERNEL_OK")
</pallas_src>

<mosaic_0001>
module attributes {stable_mosaic.version = 11 : i64} {
  func.func @fused_kernel(%arg0: i32, %arg1: memref<16x16xbf16, #tpu.memory_space<vmem>>, %arg2: memref<152x128xbf16, #tpu.memory_space<vmem>>, %arg3: memref<8x128xf32, #tpu.memory_space<vmem>>, %arg4: memref<2x128xf32, #tpu.memory_space<vmem>>) attributes {dimension_semantics = [#tpu.dimension_semantics<arbitrary>], iteration_bounds = array<i64: 1>, scalar_prefetch = 0 : i64, scratch_operands = 0 : i64, tpu.core_type = #tpu.core_type<tc>, window_params = [{pipeline_mode = #tpu.pipeline_mode<synchronous>, transform_indices = @transform_0, window_bounds = array<i64: 16, 16>}, {pipeline_mode = #tpu.pipeline_mode<synchronous>, transform_indices = @transform_1, window_bounds = array<i64: 152, 128>}, {pipeline_mode = #tpu.pipeline_mode<synchronous>, transform_indices = @transform_2, window_bounds = array<i64: 8, 128>}, {pipeline_mode = #tpu.pipeline_mode<synchronous>, transform_indices = @transform_3, window_bounds = array<i64: 2, 128>}]} {
    %c0 = arith.constant 0 : index
    %c0_0 = arith.constant 0 : index
    %0 = vector.load %arg1[%c0, %c0_0] : memref<16x16xbf16, #tpu.memory_space<vmem>>, vector<16x16xbf16>
    %c0_1 = arith.constant 0 : index
    %c0_2 = arith.constant 0 : index
    %1 = vector.load %arg2[%c0_1, %c0_2] : memref<152x128xbf16, #tpu.memory_space<vmem>>, vector<16x16xbf16>
    %cst = arith.constant dense<0.000000e+00> : vector<16x16xf32>
    %2 = tpu.matmul %0, %1, %cst {dimension_numbers = #tpu.dot_dimension_numbers<[1], [0], [0], [1], [0, 0, 1, 1], [], []>} : vector<16x16xbf16>, vector<16x16xbf16>, vector<16x16xf32> -> vector<16x16xf32>
    %3 = math.absf %2 : vector<16x16xf32>
    %cst_3 = arith.constant 9.99999993E-9 : f32
    %4 = vector.broadcast %cst_3 : f32 to vector<16x16xf32>
    %5 = arith.addf %3, %4 : vector<16x16xf32>
    %6 = math.log %5 : vector<16x16xf32>
    %7 = arith.truncf %6 : vector<16x16xf32> to vector<16x16xbf16>
    %c16 = arith.constant 16 : index
    %c0_4 = arith.constant 0 : index
    %8 = vector.load %arg2[%c16, %c0_4] : memref<152x128xbf16, #tpu.memory_space<vmem>>, vector<16x32xbf16>
    %cst_5 = arith.constant dense<0.000000e+00> : vector<16x32xf32>
    %9 = tpu.matmul %7, %8, %cst_5 {dimension_numbers = #tpu.dot_dimension_numbers<[1], [0], [0], [1], [0, 0, 1, 1], [], []>} : vector<16x16xbf16>, vector<16x32xbf16>, vector<16x32xf32> -> vector<16x32xf32>
    %c0_6 = arith.constant 0 : index
    %c0_7 = arith.constant 0 : index
    %10 = vector.load %arg3[%c0_6, %c0_7] : memref<8x128xf32, #tpu.memory_space<vmem>>, vector<1x32xf32>
    %11 = vector.broadcast %10 : vector<1x32xf32> to vector<16x32xf32>
    %12 = arith.addf %9, %11 : vector<16x32xf32>
    %13 = arith.mulf %12, %12 : vector<16x32xf32>
    %cst_8 = arith.constant dense<0.000000e+00> : vector<16xf32>
    %14 = vector.multi_reduction <add>, %13, %cst_8 [1] : vector<16x32xf32> to vector<16xf32>
    %15 = vector.shape_cast %14 : vector<16xf32> to vector<16x1xf32>
    %cst_9 = arith.constant 1.000000e-24 : f32
    %16 = vector.broadcast %cst_9 : f32 to vector<16x1xf32>
    %17 = arith.maximumf %15, %16 : vector<16x1xf32>
    %18 = math.rsqrt %17 : vector<16x1xf32>
    %19 = vector.broadcast %18 : vector<16x1xf32> to vector<16x32xf32>
    %20 = arith.mulf %12, %19 : vector<16x32xf32>
    %c32 = arith.constant 32 : index
    %c0_10 = arith.constant 0 : index
    %21 = vector.load %arg2[%c32, %c0_10] : memref<152x128xbf16, #tpu.memory_space<vmem>>, vector<16x32xbf16>
    %22 = arith.truncf %20 : vector<16x32xf32> to vector<16x32xbf16>
    %cst_11 = arith.constant dense<0.000000e+00> : vector<16x16xf32>
    %23 = tpu.matmul %22, %21, %cst_11 {dimension_numbers = #tpu.dot_dimension_numbers<[1], [1], [0], [0], [0, 0, 1, 0], [], []>} : vector<16x32xbf16>, vector<16x32xbf16>, vector<16x16xf32> -> vector<16x16xf32>
    %cst_12 = arith.constant dense<0xFF800000> : vector<16xf32>
    %24 = vector.multi_reduction <maximumf>, %23, %cst_12 [1] : vector<16x16xf32> to vector<16xf32>
    %25 = vector.shape_cast %24 : vector<16xf32> to vector<16x1xf32>
    %26 = tpu.iota {dimensions = array<i32: 1>} : vector<16x16xi32>
    %27 = vector.broadcast %25 : vector<16x1xf32> to vector<16x16xf32>
    %28 = arith.cmpf oge, %23, %27 : vector<16x16xf32>
    %c16_i32 = arith.constant 16 : i32
    %29 = vector.broadcast %c16_i32 : i32 to vector<16x16xi32>
    %30 = arith.select %28, %26, %29 : vector<16x16xi1>, vector<16x16xi32>
    %cst_13 = arith.constant dense<2147483647> : vector<16xi32>
    %31 = vector.multi_reduction <minsi>, %30, %cst_13 [1] : vector<16x16xi32> to vector<16xi32>
    %32 = vector.shape_cast %31 : vector<16xi32> to vector<16x1xi32>
    %33 = vector.broadcast %32 : vector<16x1xi32> to vector<16x16xi32>
    %34 = arith.cmpi eq, %26, %33 : vector<16x16xi32>
    %35 = arith.extui %34 : vector<16x16xi1> to vector<16x16xi32>
    %36 = arith.sitofp %35 : vector<16x16xi32> to vector<16x16xf32>
    %37 = arith.truncf %36 : vector<16x16xf32> to vector<16x16xbf16>
    %c144 = arith.constant 144 : index
    %c0_14 = arith.constant 0 : index
    %38 = vector.load %arg2[%c144, %c0_14] : memref<152x128xbf16, #tpu.memory_space<vmem>>, vector<2x16xbf16>
    %cst_15 = arith.constant dense<0.000000e+00> : vector<2x16xf32>
    %39 = tpu.matmul %38, %37, %cst_15 {dimension_numbers = #tpu.dot_dimension_numbers<[1], [0], [0], [1], [0, 0, 1, 1], [], []>} : vector<2x16xbf16>, vector<16x16xbf16>, vector<2x16xf32> -> vector<2x16xf32>
    %40 = arith.truncf %39 : vector<2x16xf32> to vector<2x16xbf16>
    %cst_16 = arith.constant dense<0.000000e+00> : vector<2x32xf32>
    %41 = tpu.matmul %40, %21, %cst_16 {dimension_numbers = #tpu.dot_dimension_numbers<[1], [0], [0], [1], [0, 0, 1, 1], [], []>} : vector<2x16xbf16>, vector<16x32xbf16>, vector<2x32xf32> -> vector<2x32xf32>
    %cst_17 = arith.constant dense<0.000000e+00> : vector<2xf32>
    %42 = vector.multi_reduction <add>, %41, %cst_17 [1] : vector<2x32xf32> to vector<2xf32>
    %43 = vector.shape_cast %42 : vector<2xf32> to vector<2x1xf32>
    %cst_18 = arith.constant 3.200000e+01 : f32
    %44 = vector.broadcast %cst_18 : f32 to vector<2x1xf32>
    %45 = arith.divf %43, %44 : vector<2x1xf32>
    %46 = vector.broadcast %45 : vector<2x1xf32> to vector<2x32xf32>
    %47 = arith.subf %41, %46 : vector<2x32xf32>
    %48 = arith.mulf %47, %47 : vector<2x32xf32>
    %cst_19 = arith.constant dense<0.000000e+00> : vector<2xf32>
    %49 = vector.multi_reduction <add>, %48, %cst_19 [1] : vector<2x32xf32> to vector<2xf32>
    %50 = vector.shape_cast %49 : vector<2xf32> to vector<2x1xf32>
    %cst_20 = arith.constant 3.200000e+01 : f32
    %51 = vector.broadcast %cst_20 : f32 to vector<2x1xf32>
    %52 = arith.divf %50, %51 : vector<2x1xf32>
    %53 = vector.broadcast %45 : vector<2x1xf32> to vector<2x32xf32>
    %54 = arith.subf %41, %53 : vector<2x32xf32>
    %cst_21 = arith.constant 9.99999974E-6 : f32
    %55 = vector.broadcast %cst_21 : f32 to vector<2x1xf32>
    %56 = arith.addf %52, %55 : vector<2x1xf32>
    %57 = math.rsqrt %56 : vector<2x1xf32>
    %58 = vector.broadcast %57 : vector<2x1xf32> to vector<2x32xf32>
    %59 = arith.mulf %54, %58 : vector<2x32xf32>
    %c1 = arith.constant 1 : index
    %c0_22 = arith.constant 0 : index
    %60 = vector.load %arg3[%c1, %c0_22] : memref<8x128xf32, #tpu.memory_space<vmem>>, vector<1x32xf32>
    %61 = vector.broadcast %60 : vector<1x32xf32> to vector<2x32xf32>
    %62 = arith.mulf %59, %61 : vector<2x32xf32>
    %c2 = arith.constant 2 : index
    %c0_23 = arith.constant 0 : index
    %63 = vector.load %arg3[%c2, %c0_23] : memref<8x128xf32, #tpu.memory_space<vmem>>, vector<1x32xf32>
    %64 = vector.broadcast %63 : vector<1x32xf32> to vector<2x32xf32>
    %65 = arith.addf %62, %64 : vector<2x32xf32>
    %66 = arith.truncf %65 : vector<2x32xf32> to vector<2x32xbf16>
    %c48 = arith.constant 48 : index
    %c0_24 = arith.constant 0 : index
    %67 = vector.load %arg2[%c48, %c0_24] : memref<152x128xbf16, #tpu.memory_space<vmem>>, vector<32x32xbf16>
    %cst_25 = arith.constant dense<0.000000e+00> : vector<2x32xf32>
    %68 = tpu.matmul %66, %67, %cst_25 {dimension_numbers = #tpu.dot_dimension_numbers<[1], [0], [0], [1], [0, 0, 1, 1], [], []>} : vector<2x32xbf16>, vector<32x32xbf16>, vector<2x32xf32> -> vector<2x32xf32>
    %c3 = arith.constant 3 : index
    %c0_26 = arith.constant 0 : index
    %69 = vector.load %arg3[%c3, %c0_26] : memref<8x128xf32, #tpu.memory_space<vmem>>, vector<1x32xf32>
    %70 = vector.broadcast %69 : vector<1x32xf32> to vector<2x32xf32>
    %71 = arith.addf %68, %70 : vector<2x32xf32>
    %cst_27 = arith.constant 0.000000e+00 : f32
    %72 = vector.broadcast %cst_27 : f32 to vector<2x32xf32>
    %73 = arith.maximumf %71, %72 : vector<2x32xf32>
    %74 = arith.truncf %73 : vector<2x32xf32> to vector<2x32xbf16>
    %c80 = arith.constant 80 : index
    %c0_28 = arith.constant 0 : index
    %75 = vector.load %arg2[%c80, %c0_28] : memref<152x128xbf16, #tpu.memory_space<vmem>>, vector<32x32xbf16>
    %cst_29 = arith.constant dense<0.000000e+00> : vector<2x32xf32>
    %76 = tpu.matmul %74, %75, %cst_29 {dimension_numbers = #tpu.dot_dimension_numbers<[1], [0], [0], [1], [0, 0, 1, 1], [], []>} : vector<2x32xbf16>, vector<32x32xbf16>, vector<2x32xf32> -> vector<2x32xf32>
    %c4 = arith.constant 4 : index
    %c0_30 = arith.constant 0 : index
    %77 = vector.load %arg3[%c4, %c0_30] : memref<8x128xf32, #tpu.memory_space<vmem>>, vector<1x32xf32>
    %78 = vector.broadcast %77 : vector<1x32xf32> to vector<2x32xf32>
    %79 = arith.addf %76, %78 : vector<2x32xf32>
    %cst_31 = arith.constant 0.000000e+00 : f32
    %80 = vector.broadcast %cst_31 : f32 to vector<2x32xf32>
    %81 = arith.maximumf %79, %80 : vector<2x32xf32>
    %82 = arith.truncf %81 : vector<2x32xf32> to vector<2x32xbf16>
    %c112 = arith.constant 112 : index
    %c0_32 = arith.constant 0 : index
    %83 = vector.load %arg2[%c112, %c0_32] : memref<152x128xbf16, #tpu.memory_space<vmem>>, vector<32x96xbf16>
    %cst_33 = arith.constant dense<0.000000e+00> : vector<2x96xf32>
    %84 = tpu.matmul %82, %83, %cst_33 {dimension_numbers = #tpu.dot_dimension_numbers<[1], [0], [0], [1], [0, 0, 1, 1], [], []>} : vector<2x32xbf16>, vector<32x96xbf16>, vector<2x96xf32> -> vector<2x96xf32>
    %c5 = arith.constant 5 : index
    %c0_34 = arith.constant 0 : index
    %85 = vector.load %arg3[%c5, %c0_34] : memref<8x128xf32, #tpu.memory_space<vmem>>, vector<1x96xf32>
    %86 = vector.broadcast %85 : vector<1x96xf32> to vector<2x96xf32>
    %87 = arith.addf %84, %86 : vector<2x96xf32>
    %88 = tpu.concatenate %65, %87 in 1 : vector<2x32xf32>, vector<2x96xf32> -> vector<2x128xf32>
    %c0_35 = arith.constant 0 : index
    %c0_36 = arith.constant 0 : index
    %89 = vector.load %arg4[%c0_35, %c0_36] : memref<2x128xf32, #tpu.memory_space<vmem>>, vector<2x128xf32>
    tpu.vector_store %arg4[%c0_35, %c0_36], %88 {strides = array<i32>} : memref<2x128xf32, #tpu.memory_space<vmem>>, vector<2x128xf32>,
    return
  }
  func.func @transform_0(%arg0: i32) -> (i32, i32) {
    %c0_i32 = arith.constant 0 : i32
    %c0_i32_0 = arith.constant 0 : i32
    %c0_i32_1 = arith.constant 0 : i32
    return %c0_i32, %c0_i32_0 : i32, i32
  }
  func.func @transform_1(%arg0: i32) -> (i32, i32) {
    %c0_i32 = arith.constant 0 : i32
    %c0_i32_0 = arith.constant 0 : i32
    %c0_i32_1 = arith.constant 0 : i32
    return %c0_i32, %c0_i32_0 : i32, i32
  }
  func.func @transform_2(%arg0: i32) -> (i32, i32) {
    %c0_i32 = arith.constant 0 : i32
    %c0_i32_0 = arith.constant 0 : i32
    %c0_i32_1 = arith.constant 0 : i32
    return %c0_i32, %c0_i32_0 : i32, i32
  }
  func.func @transform_3(%arg0: i32) -> (i32, i32) {
    %c0_i32 = arith.constant 0 : i32
    %c0_i32_0 = arith.constant 0 : i32
    %c0_i32_1 = arith.constant 0 : i32
    return %c0_i32, %c0_i32_0 : i32, i32
  }
}

</mosaic_0001>

<llo_original>
// kernel: bsiformer_vq_forward.1
$region0: #{bsiformer_vq_forward.1}
  #allocation0 [shape = 'u32[]', space=smem, size = 0x4, offset = 0x4, fixed_abs, tag = 'smem constant byte address 0x4 - core index']
  #allocation1 [shape = 'u32[72,128]{1,0:T(1,128)}', space=vmem, size = 0x9000, scoped, tag = 'internal scratch']
  %s0 = inlined_call_operand.vmem [shape: bf16[16,16], index: 0, kind: input, shape index: {}]
  %s1 = inlined_call_operand.hbm [shape: bf16[152,128], index: 1, kind: input, shape index: {}]
  %s2 = inlined_call_operand.vmem [shape: f32[8,128], index: 2, kind: input, shape index: {}]
  %s3 = inlined_call_operand.vmem [shape: f32[2,128], index: 3, kind: output, shape index: {}]
  %s4 = sld [smem:[#allocation0]]
  $region26: #{bsiformer_vq_forward.1} parent=0
    _
  %s6 = ssub.s32 1, %s4
  %s7 = scalar_select 0, %s6, %s4
  $region1: #{bsiformer_vq_forward.1} parent=0
    #allocation2 [shape = 'u8[38912]{0}', space=vmem, size = 0x9800, scoped, tag = 'input window, operand 1, single buffered']
    #allocation3 [shape = 's32[1]{0}', space=sflag, size = 0x4, scoped, tag = 'scoped memory for bsiformer_vq_forward.1']
    %8 = vsyncpa [#allocation3], 0
    // Predicated region
    $region2: #{bsiformer_vq_forward.1} parent=1 // pred_check
      _
    $region3: #{bsiformer_vq_forward.1} parent=1 // pred_check_branch
      %10 = sbr.rel (0) target = $region5
    $region4: #{bsiformer_vq_forward.1} parent=1 // pred_region
      _
    $region5: #{bsiformer_vq_forward.1} parent=1 // pred_fallthru
      _
    // Predicated region
    $region6: #{bsiformer_vq_forward.1} parent=1 // pred_check
      _
    $region7: #{bsiformer_vq_forward.1} parent=1 // pred_check_branch
      %12 = sbr.rel (0) target = $region9
    $region8: #{bsiformer_vq_forward.1} parent=1 // pred_region
      %14 = vsyncadd [#allocation3], 0
      %s15 = sshll.u32 %s1, 4
      %s16 = int_to_ptr.hbm [resolvable:$true] %s15
      %s17 = sshll.u32 [#allocation2], 4
      %s18 = int_to_ptr.vmem [resolvable:$true] %s17
      %23 = dma.hbm_to_vmem [thread:$0]  %s16, 1216, %s18, [#allocation3], 64, 64, 4
    $region9: #{bsiformer_vq_forward.1} parent=1 // pred_fallthru
      _
    // Predicated region
    $region10: #{bsiformer_vq_forward.1} parent=1 // pred_check
      _
    $region11: #{bsiformer_vq_forward.1} parent=1 // pred_check_branch
      %25 = sbr.rel (0) target = $region13
    $region12: #{bsiformer_vq_forward.1} parent=1 // pred_region
      _
    $region13: #{bsiformer_vq_forward.1} parent=1 // pred_fallthru
      _
    // Predicated region
    $region14: #{bsiformer_vq_forward.1} parent=1 // pred_check
      _
    $region15: #{bsiformer_vq_forward.1} parent=1 // pred_check_branch
      %27 = sbr.rel (0) target = $region17
    $region16: #{bsiformer_vq_forward.1} parent=1 // pred_region
      %29 = dma.done [#allocation3], 1216
    $region17: #{bsiformer_vq_forward.1} parent=1 // pred_fallthru
      _
    %v31 = vld [vmem:[%s0] sm:$0xf]
    %v32 = vld [vmem:[%s0 + $0x4] sm:$0xf]
    %v33 = vld [vmem:[#allocation2] sm:$0xf]
    %v34 = vld [vmem:[#allocation2 + $0x4] sm:$0xf]
    %v37 = vunpack.c.l.b16 %v31
    %v38 = vunpack.c.l.b16 %v32
    %v39 = vpack.c.b16 %v38, %v37
    %v42 = vunpack.c.l.b16 %v33
    %v43 = vunpack.c.l.b16 %v34
    %v44 = vpack.c.b16 %v43, %v42
    %vm46 = vcmask 130048
    %v48 = vsel %vm46, %v39, 0
    %50 = vmatpush.bf16.msra.mxu0 0
    %51 = vmatpush.bf16.msra.mxu0 0
    %52 = vmatpush.bf16.msra.mxu0 0
    %53 = vmatpush.bf16.msra.mxu0 0
    %54 = vmatpush.bf16.msra.mxu0 0
    %55 = vmatpush.bf16.msra.mxu0 0
    %56 = vmatpush.bf16.msra.mxu0 0
    %57 = vmatpush.bf16.msra.mxu0 %v44
    %58 = vmatmul.bf16.gmra.mxu0 %v48
    %v59 = vpop.f32.mrf.mxu0
    %v60 = vadd.f32 0.0, %v59
    %v61 = vpop.f32.mrf.mxu0
    %v62 = vadd.f32 0.0, %v61
    %63 = vdwg.mxu0
    %v64 = vand.u32 2147483647, %v60
    %v65 = vand.u32 2147483647, %v62
    %v66 = vadd.f32 %v64, 1e-08
    %v67 = vadd.f32 %v65, 1e-08
    %v68 = vlog2.pop %v66
    %v69 = vmul.f32 %v68, 0.6931472
    %v70 = vlog2.pop %v67
    %v71 = vmul.f32 %v70, 0.6931472
    %v72 = vpack.c.bf16 %v71, %v69
    %v73 = vld [vmem:[#allocation2 + $0x8] sm:$0xf]
    %v74 = vld [vmem:[#allocation2 + $0xc] sm:$0xf]
    %v75 = vld [vmem:[%s2] sm:$0x1]
    %v76 = vperm.slane %v75, 0
    %v79 = vunpack.c.l.b16 %v73
    %v80 = vunpack.c.l.b16 %v74
    %v81 = vpack.c.b16 %v80, %v79
    %v84 = vsel %vm46, %v72, 0
    %86 = vmatpush.bf16.msra.mxu0 0
    %87 = vmatpush.bf16.msra.mxu0 0
    %88 = vmatpush.bf16.msra.mxu0 0
    %89 = vmatpush.bf16.msra.mxu0 0
    %90 = vmatpush.bf16.msra.mxu0 0
    %91 = vmatpush.bf16.msra.mxu0 0
    %92 = vmatpush.bf16.msra.mxu0 0
    %93 = vmatpush.bf16.msra.mxu0 %v81
    %94 = vmatmul.bf16.gmra.mxu0 %v84
    %v95 = vpop.f32.mrf.mxu0
    %v96 = vadd.f32 %v76, %v95
    %v97 = vpop.f32.mrf.mxu0
    %v98 = vadd.f32 %v76, %v97
    %99 = vdwg.mxu0
    %v100 = vmul.f32 %v96, %v96
    %v101 = vmul.f32 %v98, %v98
    %vm102 = vcmask 261120
    %v103 = vsel %vm102, %v100, 0.0
    %104 = vadd.xlane.f32.xlu0 %v103
    %v105 = vpop.xlane.xlu0 %104
    %v106 = vsel %vm102, %v101, 0.0
    %107 = vadd.xlane.f32.xlu0 %v106
    %v108 = vpop.xlane.xlu0 %107
    %v109 = vmax.f32 %v105, 1e-24
    %v110 = vmax.f32 %v108, 1e-24
    %v111 = vrsqrt.pop %v109
    %v112 = vmul.f32 %v111, %v109
    %v113 = vmul.f32 %v112, %v111
    %v114 = vmul.f32 0.5, %v113
    %v115 = vsub.f32 1.5, %v114
    %v116 = vmul.f32 %v111, %v115
    %vm117 = vweird.f32 %v109
    %vm118 = vweird.f32 %v111
    %vm119 = vmor %vm117, %vm118
    %v120 = vsel %vm119, %v111, %v116
    %v121 = vrsqrt.pop %v110
    %v122 = vmul.f32 %v121, %v110
    %v123 = vmul.f32 %v122, %v121
    %v124 = vmul.f32 0.5, %v123
    %v125 = vsub.f32 1.5, %v124
    %v126 = vmul.f32 %v121, %v125
    %vm127 = vweird.f32 %v110
    %vm128 = vweird.f32 %v121
    %vm129 = vmor %vm127, %vm128
    %v130 = vsel %vm129, %v121, %v126
    %v131 = vmul.f32 %v96, %v120
    %v132 = vmul.f32 %v98, %v130
    %v133 = vld [vmem:[#allocation2 + $0x10] sm:$0xf]
    %v134 = vld [vmem:[#allocation2 + $0x14] sm:$0xf]
    %v135 = vpack.c.bf16 %v132, %v131
    %v138 = vunpack.c.l.b16 %v133
    %v139 = vunpack.c.l.b16 %v134
    %v140 = vpack.c.b16 %v139, %v138
    %v142 = vsel %vm102, %v135, 0
    %v145 = vsel %vm102, %v140, 0
    %147 = vmatpush.bf16.xpose.msra.mxu0 0
    %148 = vmatpush.bf16.xpose.msra.mxu0 0
    %149 = vmatpush.bf16.xpose.msra.mxu0 0
    %150 = vmatpush.bf16.xpose.msra.mxu0 0
    %151 = vmatpush.bf16.xpose.msra.mxu0 0
    %152 = vmatpush.bf16.xpose.msra.mxu0 0
    %153 = vmatpush.bf16.xpose.msra.mxu0 0
    %154 = vmatpush.bf16.xpose.msra.mxu0 %v145
    %155 = vmatmul.bf16.gmra.mxu0 %v142
    %v156 = vpop.f32.mrf.mxu0
    %v157 = vadd.f32 0.0, %v156
    %v158 = vpop.f32.mrf.mxu0
    %v159 = vadd.f32 0.0, %v158
    %160 = vdwg.mxu0
    %v161 = vsel %vm46, %v157, -inf
    %162 = vmax.xlane.f32.xlu0 %v161
    %v163 = vpop.xlane.xlu0 %162
    %v164 = vsel %vm46, %v159, -inf
    %165 = vmax.xlane.f32.xlu0 %v164
    %v166 = vpop.xlane.xlu0 %165
    %v167 = vlaneseq
    %v168 = vand.u32 %v167, 127
    %vm169 = vcmp.ge.f32.partialorder %v157, %v163
    %vm170 = vcmp.ge.f32.partialorder %v159, %v166
    %v171 = vsel %vm169, %v168, 16
    %v172 = vsel %vm170, %v168, 16
    %v173 = vsel %vm46, %v171, 2147483647
    %v174 = vand.u32 %v173, 65535
    %v175 = vshra.s32 %v173, 16
    %v176 = vcvt.s32.f32 %v174
    %v177 = vcvt.s32.f32 %v175
    %178 = vmin.xlane.f32.xlu0 %v177
    %v179 = vpop.xlane.xlu0 %178
    %vm180 = vcmp.eq.f32.partialorder %v177, %v179
    %v181 = vsel %vm180, %v176, inf
    %182 = vmin.xlane.f32.xlu0 %v181
    %v183 = vpop.xlane.xlu0 %182
    %v184 = vcvt.f32.s32 %v183
    %v185 = vcvt.f32.s32 %v179
    %v186 = vshll.u32 %v185, 16
    %v187 = vadd.s32 %v186, %v184
    %v188 = vsel %vm46, %v172, 2147483647
    %v189 = vand.u32 %v188, 65535
    %v190 = vshra.s32 %v188, 16
    %v191 = vcvt.s32.f32 %v189
    %v192 = vcvt.s32.f32 %v190
    %193 = vmin.xlane.f32.xlu0 %v192
    %v194 = vpop.xlane.xlu0 %193
    %vm195 = vcmp.eq.f32.partialorder %v192, %v194
    %v196 = vsel %vm195, %v191, inf
    %197 = vmin.xlane.f32.xlu0 %v196
    %v198 = vpop.xlane.xlu0 %197
    %v199 = vcvt.f32.s32 %v198
    %v200 = vcvt.f32.s32 %v194
    %v201 = vshll.u32 %v200, 16
    %v202 = vadd.s32 %v201, %v199
    %vm203 = vcmp.eq.s32.totalorder %v168, %v187
    %vm204 = vcmp.eq.s32.totalorder %v168, %v202
    %v205 = vsel %vm203, 1, 0
    %v206 = vsel %vm204, 1, 0
    %v207 = vcvt.s32.f32 %v205
    %v208 = vcvt.s32.f32 %v206
    %v209 = vpack.c.bf16 %v208, %v207
    %v210 = vld [vmem:[#allocation2 + $0x48] sm:$0x1]
    %v212 = vsel %vm46, %v210, 0
    %214 = vmatpush.bf16.msra.mxu0 0
    %215 = vmatpush.bf16.msra.mxu0 0
    %216 = vmatpush.bf16.msra.mxu0 0
    %217 = vmatpush.bf16.msra.mxu0 0
    %218 = vmatpush.bf16.msra.mxu0 0
    %219 = vmatpush.bf16.msra.mxu0 0
    %220 = vmatpush.bf16.msra.mxu0 0
    %221 = vmatpush.bf16.msra.mxu0 %v209
    %222 = vmatmul.bf16.gmra.mxu0 %v212
    %v223 = vpop.f32.mrf.mxu0
    %v224 = vadd.f32 0.0, %v223
    %v225 = vpop.f32.mrf.mxu0
    %226 = vdwg.mxu0
    %v227 = vpack.c.bf16 %v224, %v224
    %v230 = vsel %vm46, %v227, 0
    %232 = vmatpush.bf16.msra.mxu0 0
    %233 = vmatpush.bf16.msra.mxu0 0
    %234 = vmatpush.bf16.msra.mxu0 0
    %235 = vmatpush.bf16.msra.mxu0 0
    %236 = vmatpush.bf16.msra.mxu0 0
    %237 = vmatpush.bf16.msra.mxu0 0
    %238 = vmatpush.bf16.msra.mxu0 0
    %239 = vmatpush.bf16.msra.mxu0 %v140
    %240 = vmatmul.bf16.gmra.mxu0 %v230
    %v241 = vpop.f32.mrf.mxu0
    %v242 = vadd.f32 0.0, %v241
    %v243 = vpop.f32.mrf.mxu0
    %244 = vdwg.mxu0
    %vm245 = vcmask 254976
    %v246 = vsel %vm245, %v242, 0.0
    %247 = vadd.xlane.f32.xlu0 %v246
    %v248 = vpop.xlane.xlu0 %247
    %v249 = vrcp.pop 32.0
    %v250 = vmul.f32 32.0, %v249
    %v251 = vsub.f32 1.0, %v250
    %v252 = vmul.f32 %v249, %v251
    %v253 = vadd.f32 %v249, %v252
    %vm254 = vweird.f32 %v249
    %v255 = vsel %vm254, %v249, %v253
    %v256 = vmul.f32 %v248, %v255
    %v257 = vsub.f32 %v242, %v256
    %v258 = vmul.f32 %v257, %v257
    %v259 = vsel %vm245, %v258, 0.0
    %260 = vadd.xlane.f32.xlu0 %v259
    %v261 = vpop.xlane.xlu0 %260
    %v262 = vmul.f32 %v261, %v255
    %v263 = vadd.f32 %v262, 1e-05
    %v264 = vrsqrt.pop %v263
    %v265 = vmul.f32 %v264, %v263
    %v266 = vmul.f32 %v265, %v264
    %v267 = vmul.f32 0.5, %v266
    %v268 = vsub.f32 1.5, %v267
    %v269 = vmul.f32 %v264, %v268
    %vm270 = vweird.f32 %v263
    %vm271 = vweird.f32 %v264
    %vm272 = vmor %vm270, %vm271
    %v273 = vsel %vm272, %v264, %v269
    %v274 = vmul.f32 %v257, %v273
    %v275 = vld [vmem:[%s2 + $0x1] sm:$0x1]
    %v276 = vperm.slane %v275, 0
    %v277 = vmul.f32 %v274, %v276
    %v278 = vld [vmem:[%s2 + $0x2] sm:$0x1]
    %v279 = vperm.slane %v278, 0
    %v280 = vadd.f32 %v277, %v279
    %v281 = vpack.c.bf16 %v280, %v280
    %v282 = vld [vmem:[#allocation2 + $0x18] sm:$0xf]
    %v283 = vld [vmem:[#allocation2 + $0x1c] sm:$0xf]
    %v284 = vld [vmem:[#allocation2 + $0x20] sm:$0xf]
    %v285 = vld [vmem:[#allocation2 + $0x24] sm:$0xf]
    %v286 = vld [vmem:[%s2 + $0x3] sm:$0x1]
    %v287 = vperm.slane %v286, 0
    %v292 = vunpack.c.l.b16 %v282
    %v293 = vunpack.c.l.b16 %v283
    %v294 = vunpack.c.l.b16 %v284
    %v295 = vunpack.c.l.b16 %v285
    %v296 = vpack.c.b16 %v293, %v292
    %v297 = vpack.c.b16 %v295, %v294
    %v301 = vsel %vm102, %v281, 0
    %303 = vmatpush.bf16.msra.mxu0 0
    %304 = vmatpush.bf16.msra.mxu0 0
    %305 = vmatpush.bf16.msra.mxu0 0
    %306 = vmatpush.bf16.msra.mxu0 0
    %307 = vmatpush.bf16.msra.mxu0 0
    %308 = vmatpush.bf16.msra.mxu0 0
    %309 = vmatpush.bf16.msra.mxu0 %v297
    %310 = vmatpush.bf16.msra.mxu0 %v296
    %311 = vmatmul.bf16.gmra.mxu0 %v301
    %v312 = vpop.f32.mrf.mxu0
    %v313 = vadd.f32 %v287, %v312
    %v314 = vpop.f32.mrf.mxu0
    %315 = vdwg.mxu0
    %v316 = vmax.f32 %v313, 0.0
    %v317 = vpack.c.bf16 %v316, %v316
    %v318 = vld [vmem:[#allocation2 + $0x28] sm:$0xf]
    %v319 = vld [vmem:[#allocation2 + $0x2c] sm:$0xf]
    %v320 = vld [vmem:[#allocation2 + $0x30] sm:$0xf]
    %v321 = vld [vmem:[#allocation2 + $0x34] sm:$0xf]
    %v322 = vld [vmem:[%s2 + $0x4] sm:$0x1]
    %v323 = vperm.slane %v322, 0
    %v328 = vunpack.c.l.b16 %v318
    %v329 = vunpack.c.l.b16 %v319
    %v330 = vunpack.c.l.b16 %v320
    %v331 = vunpack.c.l.b16 %v321
    %v332 = vpack.c.b16 %v329, %v328
    %v333 = vpack.c.b16 %v331, %v330
    %v337 = vsel %vm102, %v317, 0
    %339 = vmatpush.bf16.msra.mxu0 0
    %340 = vmatpush.bf16.msra.mxu0 0
    %341 = vmatpush.bf16.msra.mxu0 0
    %342 = vmatpush.bf16.msra.mxu0 0
    %343 = vmatpush.bf16.msra.mxu0 0
    %344 = vmatpush.bf16.msra.mxu0 0
    %345 = vmatpush.bf16.msra.mxu0 %v333
    %346 = vmatpush.bf16.msra.mxu0 %v332
    %347 = vmatmul.bf16.gmra.mxu0 %v337
    %v348 = vpop.f32.mrf.mxu0
    %v349 = vadd.f32 %v323, %v348
    %v350 = vpop.f32.mrf.mxu0
    %351 = vdwg.mxu0
    %v352 = vmax.f32 %v349, 0.0
    %v353 = vpack.c.bf16 %v352, %v352
    %v354 = vld [vmem:[#allocation2 + $0x38] sm:$0xf]
    %v355 = vld [vmem:[#allocation2 + $0x3c] sm:$0xf]
    %v356 = vld [vmem:[#allocation2 + $0x40] sm:$0xf]
    %v357 = vld [vmem:[#allocation2 + $0x44] sm:$0xf]
    %v358 = vld [vmem:[%s2 + $0x5] sm:$0x1]
    %v359 = vperm.slane %v358, 0
    %v364 = vunpack.c.l.b16 %v354
    %v365 = vunpack.c.l.b16 %v355
    %v366 = vunpack.c.l.b16 %v356
    %v367 = vunpack.c.l.b16 %v357
    %v368 = vpack.c.b16 %v365, %v364
    %v369 = vpack.c.b16 %v367, %v366
    %v373 = vsel %vm102, %v353, 0
    %375 = vmatpush.bf16.msra.mxu0 0
    %376 = vmatpush.bf16.msra.mxu0 0
    %377 = vmatpush.bf16.msra.mxu0 0
    %378 = vmatpush.bf16.msra.mxu0 0
    %379 = vmatpush.bf16.msra.mxu0 0
    %380 = vmatpush.bf16.msra.mxu0 0
    %381 = vmatpush.bf16.msra.mxu0 %v369
    %382 = vmatpush.bf16.msra.mxu0 %v368
    %383 = vmatmul.bf16.gmra.mxu0 %v373
    %v384 = vpop.f32.mrf.mxu0
    %v385 = vadd.f32 %v359, %v384
    %v386 = vpop.f32.mrf.mxu0
    %387 = vdwg.mxu0
    %389 = vrot.lane.b32.xlu0 %v385, 32
    %v390 = vpop.permute.xlu0 %389
    %v392 = vsel %vm102, %v280, %v390
    %393 = vst [vmem:[%s3] sm:$0x3] %v392
    // Predicated region
    $region18: #{bsiformer_vq_forward.1} parent=1 // pred_check
      _
    $region19: #{bsiformer_vq_forward.1} parent=1 // pred_check_branch
      %395 = sbr.rel (0) target = $region21
    $region20: #{bsiformer_vq_forward.1} parent=1 // pred_region
      _
    $region21: #{bsiformer_vq_forward.1} parent=1 // pred_fallthru
      _
    // Predicated region
    $region22: #{bsiformer_vq_forward.1} parent=1 // pred_check
      _
    $region23: #{bsiformer_vq_forward.1} parent=1 // pred_check_branch
      %397 = sbr.rel (0) target = $region25
    $region24: #{bsiformer_vq_forward.1} parent=1 // pred_region
      _
    $region25: #{bsiformer_vq_forward.1} parent=1 // pred_fallthru
      _
    %398 = vsyncpa [#allocation3], 1

</llo_original>
